<compile_context>
chip_gen: v6e
topology: v6e:2x2x1
jax: 0.10.0
libtpu: 0.0.40
codegen_flags: <defaults>
</compile_context>

<pallas_src>
import math
from functools import partial

import jax
import jax.numpy as jnp
from jax.experimental import pallas as pl
from jax.experimental.pallas import tpu as pltpu


# ---------------------------------------------------------------------------
# Fused kernel: per batch element b
#   qkv  = x_b @ W_cat + b_cat              (MXU, f32 accumulation)
#   q,k,v split into heads via static lane slices
#   ctx  = softmax(q k^T / sqrt(Dh)) v      (batched over heads)
#   out  = concat_heads(ctx)                (lane-dense (S, H) store)
# ---------------------------------------------------------------------------
def make_fused_attn_kernel(num_heads, head_dim, hidden):
    inv_scale = 1.0 / math.sqrt(head_dim)

    def kernel(x_ref, w_ref, b_ref, o_ref):
        x = x_ref[0]                                         # (S, H)

        # Fused Q/K/V projection; accumulate in f32 on the MXU.
        qkv = jnp.dot(x, w_ref[...], preferred_element_type=jnp.float32)
        qkv = (qkv + b_ref[...].astype(jnp.float32)).astype(x.dtype)  # (S, 3H)

        def heads(col0):
            # (nH, S, Dh): stack of static lane slices (cheap leading-dim concat).
            return jnp.stack(
                [
                    qkv[:, col0 + h * head_dim : col0 + (h + 1) * head_dim]
                    for h in range(num_heads)
                ],
                axis=0,
            )

        q = heads(0) * inv_scale          # fold the scale into Q (fewer elements)
        k = heads(hidden)
        v = heads(2 * hidden)

        # scores[h, q, k]: all heads batched in one MXU dot_general (no k.T).
        scores = jnp.einsum(
            "hqd,hkd->hqk", q, k, preferred_element_type=jnp.float32
        )
        m = jnp.max(scores, axis=-1, keepdims=True)
        p = jnp.exp(scores - m)
        # EUP approx reciprocal: lives in its own VLIW slot, near-free next to exp.
        p = p * pl.reciprocal(jnp.sum(p, axis=-1, keepdims=True), approx=True)
        # TODO(synk): attention-probs dropout (train-mode) not implemented (eval mode).

        ctx = jnp.einsum(
            "hqk,hkd->hqd", p.astype(v.dtype), v, preferred_element_type=jnp.float32
        )

        # Lane-dense store in (S, H) layout: concat heads along the lane axis.
        out = jnp.concatenate([ctx[h] for h in range(num_heads)], axis=-1)
        o_ref[0] = out.astype(o_ref.dtype)

    return kernel


# ---------------------------------------------------------------------------
# Parameter preparation (done ONCE, at load time, not per forward call).
# ---------------------------------------------------------------------------
def prepare_qkv_params(wq, bq, wk, bk, wv, bv):
    """Fold the three torch-Linear (out, in) weights into one (H, 3H) matmul."""
    w_cat = jnp.concatenate([wq.T, wk.T, wv.T], axis=1)      # (H, 3H)
    b_cat = jnp.concatenate([bq, bk, bv], axis=0)[None, :]   # (1, 3H)
    return w_cat, b_cat


# ---------------------------------------------------------------------------
# Wrapper
# ---------------------------------------------------------------------------
@partial(jax.jit, static_argnames=("num_heads",))
def self_attention(hidden_states, w_cat, b_cat, num_heads):
    """hidden_states: (B, S, H). w_cat: (H, 3H), b_cat: (1, 3H)."""
    B, S, H = hidden_states.shape
    Dh = H // num_heads

    return pl.pallas_call(
        make_fused_attn_kernel(num_heads, Dh, H),
        out_shape=jax.ShapeDtypeStruct((B, S, H), hidden_states.dtype),
        grid=(B,),
        in_specs=[
            pl.BlockSpec((1, S, H), lambda b: (b, 0, 0)),
            # Constant index_map -> weight / bias blocks stay resident in VMEM.
            pl.BlockSpec((H, 3 * H), lambda b: (0, 0)),
            pl.BlockSpec((1, 3 * H), lambda b: (0, 0)),
        ],
        out_specs=pl.BlockSpec((1, S, H), lambda b: (b, 0, 0)),
        compiler_params=pltpu.CompilerParams(
            # Batch axis is independent -> megacore sharding on dual-TC chips.
            dimension_semantics=("parallel",),
            vmem_limit_bytes=64 * 1024 * 1024,
        ),
    )(hidden_states, w_cat, b_cat)


# ---------------------------------------------------------------------------
# Pure-JAX reference (mirrors the PyTorch forward, eval mode)
# ---------------------------------------------------------------------------
def self_attention_ref(x, wq, bq, wk, bk, wv, bv, num_heads):
    B, S, H = x.shape
    Dh = H // num_heads

    def lin(t, w, b):
        return t @ w.T + b

    def to_heads(t):
        return t.reshape(B, S, num_heads, Dh).transpose(0, 2, 1, 3)

    qh = to_heads(lin(x, wq, bq))
    kh = to_heads(lin(x, wk, bk))
    vh = to_heads(lin(x, wv, bv))
    scores = jnp.einsum("bhqd,bhkd->bhqk", qh, kh) / math.sqrt(Dh)
    probs = jax.nn.softmax(scores, axis=-1)
    ctx = jnp.einsum("bhqk,bhkd->bhqd", probs, vh)
    return ctx.transpose(0, 2, 1, 3).reshape(B, S, H)


if __name__ == "__main__":
    # Small shapes consistent with the module: hidden=32, heads=4 -> head_dim=8.
    B, S, H, NH = 2, 8, 32, 4

    key = jax.random.PRNGKey(0)
    kx, kwq, kbq, kwk, kbk, kwv, kbv = jax.random.split(key, 7)

    x = jax.random.normal(kx, (B, S, H), dtype=jnp.float32)

    init_scale = 1.0 / math.sqrt(H)
    wq = jax.random.uniform(kwq, (H, H), jnp.float32, -init_scale, init_scale)
    bq = jax.random.uniform(kbq, (H,), jnp.float32, -init_scale, init_scale)
    wk = jax.random.uniform(kwk, (H, H), jnp.float32, -init_scale, init_scale)
    bk = jax.random.uniform(kbk, (H,), jnp.float32, -init_scale, init_scale)
    wv = jax.random.uniform(kwv, (H, H), jnp.float32, -init_scale, init_scale)
    bv = jax.random.uniform(kbv, (H,), jnp.float32, -init_scale, init_scale)

    # Weight fusion is done once at parameter-load time, not per forward call.
    w_cat, b_cat = prepare_qkv_params(wq, bq, wk, bk, wv, bv)

    out = self_attention(x, w_cat, b_cat, NH)
    out = jax.block_until_ready(out)

    ref = self_attention_ref(x, wq, bq, wk, bk, wv, bv, NH)
    assert out.shape == (B, S, H)
    # Tolerance relaxed from 1e-5 because of the EUP approx reciprocal in softmax.
    assert jnp.allclose(out, ref, atol=2e-3, rtol=2e-3), "mismatch vs reference"

    print("KERNEL_OK")
</pallas_src>

<mosaic_0001>
module attributes {stable_mosaic.version = 11 : i64} {
  func.func @kernel(%arg0: i32, %arg1: memref<1x8x32xf32, #tpu.memory_space<vmem>>, %arg2: memref<32x96xf32, #tpu.memory_space<vmem>>, %arg3: memref<1x96xf32, #tpu.memory_space<vmem>>, %arg4: memref<1x8x32xf32, #tpu.memory_space<vmem>>) attributes {dimension_semantics = [#tpu.dimension_semantics<parallel>], iteration_bounds = array<i64: 2>, scalar_prefetch = 0 : i64, scratch_operands = 0 : i64, tpu.core_type = #tpu.core_type<tc>, window_params = [{transform_indices = @transform_0, window_bounds = array<i64: 1, 8, 32>}, {pipeline_mode = #tpu.pipeline_mode<synchronous>, transform_indices = @transform_1, window_bounds = array<i64: 32, 96>}, {pipeline_mode = #tpu.pipeline_mode<synchronous>, transform_indices = @transform_2, window_bounds = array<i64: 1, 96>}, {transform_indices = @transform_3, window_bounds = array<i64: 1, 8, 32>}]} {
    %c0 = arith.constant 0 : index
    %c0_0 = arith.constant 0 : index
    %c0_1 = arith.constant 0 : index
    %0 = vector.load %arg1[%c0, %c0_0, %c0_1] : memref<1x8x32xf32, #tpu.memory_space<vmem>>, vector<1x8x32xf32>
    %1 = vector.shape_cast %0 : vector<1x8x32xf32> to vector<8x32xf32>
    %c0_2 = arith.constant 0 : index
    %c0_3 = arith.constant 0 : index
    %2 = vector.load %arg2[%c0_2, %c0_3] : memref<32x96xf32, #tpu.memory_space<vmem>>, vector<32x96xf32>
    %cst = arith.constant dense<0.000000e+00> : vector<8x96xf32>
    %3 = tpu.matmul %1, %2, %cst {dimension_numbers = #tpu.dot_dimension_numbers<[1], [0], [0], [1], [0, 0, 1, 1], [], []>} : vector<8x32xf32>, vector<32x96xf32>, vector<8x96xf32> -> vector<8x96xf32>
    %c0_4 = arith.constant 0 : index
    %c0_5 = arith.constant 0 : index
    %4 = vector.load %arg3[%c0_4, %c0_5] : memref<1x96xf32, #tpu.memory_space<vmem>>, vector<1x96xf32>
    %5 = vector.broadcast %4 : vector<1x96xf32> to vector<8x96xf32>
    %6 = arith.addf %3, %5 : vector<8x96xf32>
    %7 = vector.extract_strided_slice %6 {offsets = [0, 0], sizes = [8, 8], strides = [1, 1]} : vector<8x96xf32> to vector<8x8xf32>
    %8 = vector.extract_strided_slice %6 {offsets = [0, 8], sizes = [8, 8], strides = [1, 1]} : vector<8x96xf32> to vector<8x8xf32>
    %9 = vector.extract_strided_slice %6 {offsets = [0, 16], sizes = [8, 8], strides = [1, 1]} : vector<8x96xf32> to vector<8x8xf32>
    %10 = vector.extract_strided_slice %6 {offsets = [0, 24], sizes = [8, 8], strides = [1, 1]} : vector<8x96xf32> to vector<8x8xf32>
    %11 = vector.shape_cast %7 : vector<8x8xf32> to vector<1x8x8xf32>
    %12 = vector.shape_cast %8 : vector<8x8xf32> to vector<1x8x8xf32>
    %13 = vector.shape_cast %9 : vector<8x8xf32> to vector<1x8x8xf32>
    %14 = vector.shape_cast %10 : vector<8x8xf32> to vector<1x8x8xf32>
    %15 = tpu.concatenate %11, %12, %13, %14 in 0 : vector<1x8x8xf32>, vector<1x8x8xf32>, vector<1x8x8xf32>, vector<1x8x8xf32> -> vector<4x8x8xf32>
    %cst_6 = arith.constant 0.353553385 : f32
    %16 = vector.broadcast %cst_6 : f32 to vector<4x8x8xf32>
    %17 = arith.mulf %15, %16 : vector<4x8x8xf32>
    %18 = vector.extract_strided_slice %6 {offsets = [0, 32], sizes = [8, 8], strides = [1, 1]} : vector<8x96xf32> to vector<8x8xf32>
    %19 = vector.extract_strided_slice %6 {offsets = [0, 40], sizes = [8, 8], strides = [1, 1]} : vector<8x96xf32> to vector<8x8xf32>
    %20 = vector.extract_strided_slice %6 {offsets = [0, 48], sizes = [8, 8], strides = [1, 1]} : vector<8x96xf32> to vector<8x8xf32>
    %21 = vector.extract_strided_slice %6 {offsets = [0, 56], sizes = [8, 8], strides = [1, 1]} : vector<8x96xf32> to vector<8x8xf32>
    %22 = vector.shape_cast %18 : vector<8x8xf32> to vector<1x8x8xf32>
    %23 = vector.shape_cast %19 : vector<8x8xf32> to vector<1x8x8xf32>
    %24 = vector.shape_cast %20 : vector<8x8xf32> to vector<1x8x8xf32>
    %25 = vector.shape_cast %21 : vector<8x8xf32> to vector<1x8x8xf32>
    %26 = tpu.concatenate %22, %23, %24, %25 in 0 : vector<1x8x8xf32>, vector<1x8x8xf32>, vector<1x8x8xf32>, vector<1x8x8xf32> -> vector<4x8x8xf32>
    %27 = vector.extract_strided_slice %6 {offsets = [0, 64], sizes = [8, 8], strides = [1, 1]} : vector<8x96xf32> to vector<8x8xf32>
    %28 = vector.extract_strided_slice %6 {offsets = [0, 72], sizes = [8, 8], strides = [1, 1]} : vector<8x96xf32> to vector<8x8xf32>
    %29 = vector.extract_strided_slice %6 {offsets = [0, 80], sizes = [8, 8], strides = [1, 1]} : vector<8x96xf32> to vector<8x8xf32>
    %30 = vector.extract_strided_slice %6 {offsets = [0, 88], sizes = [8, 8], strides = [1, 1]} : vector<8x96xf32> to vector<8x8xf32>
    %31 = vector.shape_cast %27 : vector<8x8xf32> to vector<1x8x8xf32>
    %32 = vector.shape_cast %28 : vector<8x8xf32> to vector<1x8x8xf32>
    %33 = vector.shape_cast %29 : vector<8x8xf32> to vector<1x8x8xf32>
    %34 = vector.shape_cast %30 : vector<8x8xf32> to vector<1x8x8xf32>
    %35 = tpu.concatenate %31, %32, %33, %34 in 0 : vector<1x8x8xf32>, vector<1x8x8xf32>, vector<1x8x8xf32>, vector<1x8x8xf32> -> vector<4x8x8xf32>
    "tpu.trace_start"() <{level = 10 : i32, message = "hqd,hkd->hqk"}> : () -> ()
    %cst_7 = arith.constant dense<0.000000e+00> : vector<4x8x8xf32>
    %36 = tpu.matmul %17, %26, %cst_7 {dimension_numbers = #tpu.dot_dimension_numbers<[2], [2], [1], [1], [0, 0, 0, 1, 1, 1], [0], [0]>} : vector<4x8x8xf32>, vector<4x8x8xf32>, vector<4x8x8xf32> -> vector<4x8x8xf32>
    "tpu.trace_stop"() : () -> ()
    %cst_8 = arith.constant dense<0xFF800000> : vector<4x8xf32>
    %37 = vector.multi_reduction <maximumf>, %36, %cst_8 [2] : vector<4x8x8xf32> to vector<4x8xf32>
    %38 = vector.shape_cast %37 : vector<4x8xf32> to vector<4x8x1xf32>
    %39 = vector.broadcast %38 : vector<4x8x1xf32> to vector<4x8x8xf32>
    %40 = arith.subf %36, %39 : vector<4x8x8xf32>
    %41 = math.exp %40 : vector<4x8x8xf32>
    %cst_9 = arith.constant dense<0.000000e+00> : vector<4x8xf32>
    %42 = vector.multi_reduction <add>, %41, %cst_9 [2] : vector<4x8x8xf32> to vector<4x8xf32>
    %43 = vector.shape_cast %42 : vector<4x8xf32> to vector<4x8x1xf32>
    %44 = tpu.reciprocal %43 {approx = true} : vector<4x8x1xf32> -> vector<4x8x1xf32>
    %45 = vector.broadcast %44 : vector<4x8x1xf32> to vector<4x8x8xf32>
    %46 = arith.mulf %41, %45 : vector<4x8x8xf32>
    "tpu.trace_start"() <{level = 10 : i32, message = "hqk,hkd->hqd"}> : () -> ()
    %cst_10 = arith.constant dense<0.000000e+00> : vector<4x8x8xf32>
    %47 = tpu.matmul %46, %35, %cst_10 {dimension_numbers = #tpu.dot_dimension_numbers<[2], [1], [1], [2], [0, 0, 0, 1, 1, 2], [0], [0]>} : vector<4x8x8xf32>, vector<4x8x8xf32>, vector<4x8x8xf32> -> vector<4x8x8xf32>
    "tpu.trace_stop"() : () -> ()
    %48 = vector.extract_strided_slice %47 {offsets = [0, 0, 0], sizes = [1, 8, 8], strides = [1, 1, 1]} : vector<4x8x8xf32> to vector<1x8x8xf32>
    %49 = vector.shape_cast %48 : vector<1x8x8xf32> to vector<8x8xf32>
    %50 = vector.extract_strided_slice %47 {offsets = [1, 0, 0], sizes = [1, 8, 8], strides = [1, 1, 1]} : vector<4x8x8xf32> to vector<1x8x8xf32>
    %51 = vector.shape_cast %50 : vector<1x8x8xf32> to vector<8x8xf32>
    %52 = vector.extract_strided_slice %47 {offsets = [2, 0, 0], sizes = [1, 8, 8], strides = [1, 1, 1]} : vector<4x8x8xf32> to vector<1x8x8xf32>
    %53 = vector.shape_cast %52 : vector<1x8x8xf32> to vector<8x8xf32>
    %54 = vector.extract_strided_slice %47 {offsets = [3, 0, 0], sizes = [1, 8, 8], strides = [1, 1, 1]} : vector<4x8x8xf32> to vector<1x8x8xf32>
    %55 = vector.shape_cast %54 : vector<1x8x8xf32> to vector<8x8xf32>
    %56 = tpu.concatenate %49, %51, %53, %55 in 1 : vector<8x8xf32>, vector<8x8xf32>, vector<8x8xf32>, vector<8x8xf32> -> vector<8x32xf32>
    %c0_11 = arith.constant 0 : index
    %c0_12 = arith.constant 0 : index
    %c0_13 = arith.constant 0 : index
    %57 = vector.load %arg4[%c0_11, %c0_12, %c0_13] : memref<1x8x32xf32, #tpu.memory_space<vmem>>, vector<1x8x32xf32>
    %58 = vector.shape_cast %57 : vector<1x8x32xf32> to vector<8x32xf32>
    %59 = vector.shape_cast %56 : vector<8x32xf32> to vector<1x8x32xf32>
    tpu.vector_store %arg4[%c0_11, %c0_12, %c0_13], %59 {strides = array<i32>} : memref<1x8x32xf32, #tpu.memory_space<vmem>>, vector<1x8x32xf32>,
    return
  }
  func.func @transform_0(%arg0: i32) -> (i32, i32, i32) {
    %c0_i32 = arith.constant 0 : i32
    %c0_i32_0 = arith.constant 0 : i32
    %c0_i32_1 = arith.constant 0 : i32
    return %arg0, %c0_i32, %c0_i32_0 : i32, i32, i32
  }
  func.func @transform_1(%arg0: i32) -> (i32, i32) {
    %c0_i32 = arith.constant 0 : i32
    %c0_i32_0 = arith.constant 0 : i32
    %c0_i32_1 = arith.constant 0 : i32
    return %c0_i32, %c0_i32_0 : i32, i32
  }
  func.func @transform_2(%arg0: i32) -> (i32, i32) {
    %c0_i32 = arith.constant 0 : i32
    %c0_i32_0 = arith.constant 0 : i32
    %c0_i32_1 = arith.constant 0 : i32
    return %c0_i32, %c0_i32_0 : i32, i32
  }
  func.func @transform_3(%arg0: i32) -> (i32, i32, i32) {
    %c0_i32 = arith.constant 0 : i32
    %c0_i32_0 = arith.constant 0 : i32
    %c0_i32_1 = arith.constant 0 : i32
    return %arg0, %c0_i32, %c0_i32_0 : i32, i32, i32
  }
}

</mosaic_0001>

<llo_original>
// kernel: self_attention.1
$region0: #{self_attention.1}
  #allocation0 [shape = 'u32[]', space=smem, size = 0x4, offset = 0x4, fixed_abs, tag = 'smem constant byte address 0x4 - core index']
  #allocation1 [shape = 'u32[144,128]{1,0:T(1,128)}', space=vmem, size = 0x12000, scoped, tag = 'internal scratch']
  %s0 = inlined_call_operand.hbm [shape: f32[2,8,32], index: 0, kind: input, shape index: {}]
  %s1 = inlined_call_operand.hbm [shape: f32[32,96], index: 1, kind: input, shape index: {}]
  %s2 = inlined_call_operand.vmem [shape: f32[1,96], index: 2, kind: input, shape index: {}]
  %s3 = inlined_call_operand.hbm [shape: f32[2,8,32], index: 3, kind: output, shape index: {}]
  %s4 = sld [smem:[#allocation0]]
  $region53: #{self_attention.1} parent=0
    _
  %s6 = ssub.s32 1, %s4
  %s7 = scalar_select 0, %s6, %s4
  $region1: #{self_attention.1} parent=0
    #allocation2 [shape = 'u8[8192]{0}', space=vmem, size = 0x2000, scoped, tag = 'input window, operand 0']
    #allocation3 [shape = 's32[2]{0}', space=sflag, size = 0x8, scoped, tag = 'scoped memory for self_attention.1']
    #allocation4 [shape = 's32[2]{0}', space=sflag, size = 0x8, scoped, tag = 'scoped memory for self_attention.1']
    #allocation5 [shape = 'u8[16384]{0}', space=vmem, size = 0x4000, scoped, tag = 'input window, operand 1, single buffered']
    #allocation6 [shape = 's32[1]{0}', space=sflag, size = 0x4, scoped, tag = 'scoped memory for self_attention.1']
    #allocation7 [shape = 'u8[8192]{0}', space=vmem, size = 0x2000, scoped, tag = 'output window, operand 0']
    %8 = vsyncpa [#allocation3], 0
    %s9 = scalar_lea.sflag [#allocation3], 1
    %10 = vsyncpa %s9, 0
    %11 = vsyncpa [#allocation6], 0
    %12 = vsyncpa [#allocation4], 0
    %s13 = scalar_lea.sflag [#allocation4], 1
    %14 = vsyncpa %s13, 0
    loop: start=0, step=1, limit=4
    $region2: #{self_attention.1} parent=1 // loop_pre_header
      _
    $region3: #{self_attention.1} parent=1 // loop_header
      %s16 = sphi 0, %s20
      %p17 = scmp.ge.s32.totalorder %s16, 4
      %s26 = sphi 0, %s28
      %s29 = sphi 0, %s26
      %s30 = sphi 0, %s29
      %s46 = sphi 0, %s30
      %s50 = sphi 0, %s50
      %s52 = sphi 0, %s50
      %s53 = sphi 0, %s52
      %s67 = sphi 0, %s53
      %s71 = sphi 0, %s71
      %s73 = sphi 0, %s71
      %s74 = sphi 0, %s73
      %s88 = sphi 0, %s74
      %s94 = sphi 0, %s96
      %s97 = sphi 0, %s94
      %s98 = sphi 0, %s97
      %s114 = sphi 0, %s98
    $region4: #{self_attention.1} parent=1 // loop_header_branch
      %19 = sbr.rel (%p17) target = $region8
    $region5: #{self_attention.1} parent=1 // loop_body
      %s21 = ssub.s32 %s16, 1
      %s22 = ssub.s32 %s16, 2
      %s23 = sadd.s32 %s16, 1
      %s24 = ssub.s32 %s16, %s23
      %p25 = scmp.eq.s32.totalorder %s24, 0
      %s27 = sadd.s32 %s26, 1
      %s28 = scalar_select %p25, %s26, %s27
      %p31 = pneg %p25
      %p32 = scmp.eq.s32.totalorder %s16, 1
      %p33 = por %p31, %p32
      %p34 = scmp.ne.s32.totalorder %s26, %s29
      %p35 = scmp.eq.s32.totalorder %s16, 0
      %p36 = por %p34, %p35
      %p37 = scmp.ne.s32.totalorder %s26, %s29
      %p38 = scmp.eq.s32.totalorder %s21, 1
      %p39 = por %p37, %p38
      %p40 = scmp.ne.s32.totalorder %s29, %s30
      %p41 = scmp.eq.s32.totalorder %s21, 0
      %p42 = por %p40, %p41
      %p43 = scmp.ne.s32.totalorder %s29, %s30
      %p44 = scmp.eq.s32.totalorder %s22, 1
      %p45 = por %p43, %p44
      %p47 = scmp.ne.s32.totalorder %s30, %s46
      %p48 = scmp.eq.s32.totalorder %s22, 0
      %p49 = por %p47, %p48
      %s51 = sadd.s32 %s50, 1
      %p54 = scmp.eq.s32.totalorder %s16, 1
      %p55 = scmp.ne.s32.totalorder %s50, %s52
      %p56 = scmp.eq.s32.totalorder %s16, 0
      %p57 = por %p55, %p56
      %p58 = scmp.ne.s32.totalorder %s50, %s52
      %p59 = scmp.eq.s32.totalorder %s21, 1
      %p60 = por %p58, %p59
      %p61 = scmp.ne.s32.totalorder %s52, %s53
      %p62 = scmp.eq.s32.totalorder %s21, 0
      %p63 = por %p61, %p62
      %p64 = scmp.ne.s32.totalorder %s52, %s53
      %p65 = scmp.eq.s32.totalorder %s22, 1
      %p66 = por %p64, %p65
      %p68 = scmp.ne.s32.totalorder %s53, %s67
      %p69 = scmp.eq.s32.totalorder %s22, 0
      %p70 = por %p68, %p69
      %s72 = sadd.s32 %s71, 1
      %p75 = scmp.eq.s32.totalorder %s16, 1
      %p76 = scmp.ne.s32.totalorder %s71, %s73
      %p77 = scmp.eq.s32.totalorder %s16, 0
      %p78 = por %p76, %p77
      %p79 = scmp.ne.s32.totalorder %s71, %s73
      %p80 = scmp.eq.s32.totalorder %s21, 1
      %p81 = por %p79, %p80
      %p82 = scmp.ne.s32.totalorder %s73, %s74
      %p83 = scmp.eq.s32.totalorder %s21, 0
      %p84 = por %p82, %p83
      %p85 = scmp.ne.s32.totalorder %s73, %s74
      %p86 = scmp.eq.s32.totalorder %s22, 1
      %p87 = por %p85, %p86
      %p89 = scmp.ne.s32.totalorder %s74, %s88
      %p90 = scmp.eq.s32.totalorder %s22, 0
      %p91 = por %p89, %p90
      %s92 = ssub.s32 %s16, %s23
      %p93 = scmp.eq.s32.totalorder %s92, 0
      %s95 = sadd.s32 %s94, 1
      %s96 = scalar_select %p93, %s94, %s95
      %p99 = pneg %p93
      %p100 = scmp.eq.s32.totalorder %s16, 1
      %p101 = por %p99, %p100
      %p102 = scmp.ne.s32.totalorder %s94, %s97
      %p103 = scmp.eq.s32.totalorder %s16, 0
      %p104 = por %p102, %p103
      %p105 = scmp.ne.s32.totalorder %s94, %s97
      %p106 = scmp.eq.s32.totalorder %s21, 1
      %p107 = por %p105, %p106
      %p108 = scmp.ne.s32.totalorder %s97, %s98
      %p109 = scmp.eq.s32.totalorder %s21, 0
      %p110 = por %p108, %p109
      %p111 = scmp.ne.s32.totalorder %s97, %s98
      %p112 = scmp.eq.s32.totalorder %s22, 1
      %p113 = por %p111, %p112
      %p115 = scmp.ne.s32.totalorder %s98, %s114
      %p116 = scmp.eq.s32.totalorder %s22, 0
      %p117 = por %p115, %p116
      %p118 = scmp.le.s32.totalorder 1, %s16
      %p119 = scmp.lt.s32.totalorder %s16, 3
      %p120 = pnand %p118, %p119
      %p121 = pneg %p120
      // Predicated region
      $region9: #{self_attention.1} parent=5 // pred_check
        _
      $region10: #{self_attention.1} parent=5 // pred_check_branch
        %123 = sbr.rel (%p120) target = $region12
      $region11: #{self_attention.1} parent=5 // pred_region
        %s124 = ssub.s32 %s16, 1
        // Predicated region
        $region13: #{self_attention.1} parent=11 // pred_check
          %p125 = pneg %p63
        $region14: #{self_attention.1} parent=11 // pred_check_branch
          %127 = sbr.rel (%p125) target = $region16
        $region15: #{self_attention.1} parent=11 // pred_region
          %s129 = ssub.s32 512, 512
          %130 = vsyncadd [#allocation6], %s129
          %s131 = sshll.u32 [#allocation5], 4
          %s132 = int_to_ptr.vmem [resolvable:$true] %s131
          %137 = dma.hbm_to_vmem [thread:$0]  %s1, 512, %s132, [#allocation6], 128, 128, 8
        $region16: #{self_attention.1} parent=11 // pred_fallthru
          _
        // Predicated region
        $region17: #{self_attention.1} parent=11 // pred_check
          %p138 = pneg %p84
        $region18: #{self_attention.1} parent=11 // pred_check_branch
          %140 = sbr.rel (%p138) target = $region20
        $region19: #{self_attention.1} parent=11 // pred_region
          _
        $region20: #{self_attention.1} parent=11 // pred_fallthru
          _
      $region12: #{self_attention.1} parent=5 // pred_fallthru
        _
      %p141 = scmp.lt.s32.totalorder %s16, 2
      // Predicated region
      $region21: #{self_attention.1} parent=5 // pred_check
        %p142 = pneg %p141
      $region22: #{self_attention.1} parent=5 // pred_check_branch
        %144 = sbr.rel (%p142) target = $region24
      $region23: #{self_attention.1} parent=5 // pred_region
        // Predicated region
        $region25: #{self_attention.1} parent=23 // pred_check
          %p145 = pneg %p36
        $region26: #{self_attention.1} parent=23 // pred_check_branch
          %147 = sbr.rel (%p145) target = $region28
        $region27: #{self_attention.1} parent=23 // pred_region
          %s148 = sand.u32 %s26, 1
          %s149 = scalar_lea.sflag [#allocation3], %s148
          %s150 = sand.u32 %s26, 1
          %s151 = smul.addr %s150, 8
          %s152 = scalar_lea.vmem [#allocation2], %s151
          %s154 = ssub.s32 128, 128
          %155 = vsyncadd %s149, %s154
          %s156 = smul.addr %s16, 128
          %s157 = scalar_lea.hbm %s0, %s156
          %s159 = sshll.u32 %s152, 4
          %s160 = int_to_ptr.vmem [resolvable:$true] %s159
          %162 = dma.hbm_to_vmem [thread:$0]  %s157, 128, %s160, %s149
        $region28: #{self_attention.1} parent=23 // pred_fallthru
          _
      $region24: #{self_attention.1} parent=5 // pred_fallthru
        _
      %p163 = scmp.le.s32.totalorder 1, %s16
      %p164 = scmp.lt.s32.totalorder %s16, 3
      %p165 = pnand %p163, %p164
      %p166 = pneg %p165
      // Predicated region
      $region29: #{self_attention.1} parent=5 // pred_check
        _
      $region30: #{self_attention.1} parent=5 // pred_check_branch
        %168 = sbr.rel (%p165) target = $region32
      $region31: #{self_attention.1} parent=5 // pred_region
        %s169 = ssub.s32 %s16, 1
        %s170 = sand.u32 %s29, 1
        %s171 = scalar_lea.sflag [#allocation3], %s170
        %s172 = sand.u32 %s29, 1
        %s173 = smul.addr %s172, 8
        %s174 = scalar_lea.vmem [#allocation2], %s173
        // Predicated region
        $region33: #{self_attention.1} parent=31 // pred_check
          %p175 = pneg %p42
        $region34: #{self_attention.1} parent=31 // pred_check_branch
          %177 = sbr.rel (%p175) target = $region36
        $region35: #{self_attention.1} parent=31 // pred_region
          %178 = dma.done %s171, 128
        $region36: #{self_attention.1} parent=31 // pred_fallthru
          _
        // Predicated region
        $region37: #{self_attention.1} parent=31 // pred_check
          %p179 = pneg %p63
        $region38: #{self_attention.1} parent=31 // pred_check_branch
          %181 = sbr.rel (%p179) target = $region40
        $region39: #{self_attention.1} parent=31 // pred_region
          %182 = dma.done [#allocation6], 512
        $region40: #{self_attention.1} parent=31 // pred_fallthru
          _
        %s183 = sand.u32 %s29, 1
        %s184 = scalar_lea.sflag [#allocation3], %s183
        %s185 = sand.u32 %s29, 1
        %s186 = smul.addr %s185, 8
        %s187 = scalar_lea.vmem [#allocation2], %s186
        %p188 = pneg %p42
        %p189 = pneg %p39
        %p190 = pneg %p63
        %p191 = pneg %p60
        %p192 = pneg %p84
        %p193 = pneg %p81
        %p194 = pneg %p110
        %p195 = pneg %p107
        %s196 = sand.u32 %s97, 1
        %s197 = scalar_lea.sflag [#allocation4], %s196
        %s198 = sand.u32 %s97, 1
        %s199 = smul.addr %s198, 8
        %s200 = scalar_lea.vmem [#allocation7], %s199
        %v201 = vld [vmem:[%s174] sm:$0xff]
        %v202 = vld [vmem:[#allocation5] sm:$0xff]
        %v203 = vld [vmem:[#allocation5 + $0x8] sm:$0xff]
        %v204 = vld [vmem:[#allocation5 + $0x10] sm:$0xff]
        %v205 = vld [vmem:[#allocation5 + $0x18] sm:$0xff]
        %v206 = vld [vmem:[%s2] sm:$0x1]
        %v208 = vlaneseq
        %v209 = vshrl.u32 %v208, 7
        %v210 = vsub.s32 0, %v209
        %v211 = vrot.slane %v206, %v210
        %vm213 = vcmask 261120
        %v215 = vsel %vm213, %v201, 0
        %217 = vmatprep.subr.mxu0 0.0
        %218 = vmatpush1.msra.mxu0 0.0
        %219 = vmatprep.subr.mxu0 0.0
        %220 = vmatpush1.msra.mxu0 0.0
        %221 = vmatprep.subr.mxu0 0.0
        %222 = vmatpush1.msra.mxu0 0.0
        %223 = vmatprep.subr.mxu0 0.0
        %224 = vmatpush1.msra.mxu0 0.0
        %225 = vmatprep.subr.mxu0 0.0
        %226 = vmatpush1.msra.mxu0 0.0
        %227 = vmatprep.subr.mxu0 0.0
        %228 = vmatpush1.msra.mxu0 0.0
        %229 = vmatprep.subr.mxu0 0.0
        %230 = vmatpush1.msra.mxu0 0.0
        %231 = vmatprep.subr.mxu0 0.0
        %232 = vmatpush1.msra.mxu0 0.0
        %233 = vmatprep.subr.mxu0 0.0
        %234 = vmatpush1.msra.mxu0 0.0
        %235 = vmatprep.subr.mxu0 0.0
        %236 = vmatpush1.msra.mxu0 0.0
        %237 = vmatprep.subr.mxu0 0.0
        %238 = vmatpush1.msra.mxu0 0.0
        %239 = vmatprep.subr.mxu0 0.0
        %240 = vmatpush1.msra.mxu0 0.0
        %241 = vmatprep.subr.mxu0 0.0
        %242 = vmatpush1.msra.mxu0 %v205
        %243 = vmatprep.subr.mxu0 0.0
        %244 = vmatpush1.msra.mxu0 %v204
        %245 = vmatprep.subr.mxu0 0.0
        %246 = vmatpush1.msra.mxu0 %v203
        %247 = vmatprep.subr.mxu0 0.0
        %248 = vmatpush1.msra.mxu0 %v202
        %249 = vmatprep.subr.mxu0 0.0
        %250 = vmatpush2.msra.mxu0 0.0
        %251 = vmatprep.subr.mxu0 0.0
        %252 = vmatpush2.msra.mxu0 0.0
        %253 = vmatprep.subr.mxu0 0.0
        %254 = vmatpush2.msra.mxu0 0.0
        %255 = vmatprep.subr.mxu0 0.0
        %256 = vmatpush2.msra.mxu0 0.0
        %257 = vmatprep.subr.mxu0 0.0
        %258 = vmatpush2.msra.mxu0 0.0
        %259 = vmatprep.subr.mxu0 0.0
        %260 = vmatpush2.msra.mxu0 0.0
        %261 = vmatprep.subr.mxu0 0.0
        %262 = vmatpush2.msra.mxu0 0.0
        %263 = vmatprep.subr.mxu0 0.0
        %264 = vmatpush2.msra.mxu0 0.0
        %265 = vmatprep.subr.mxu0 0.0
        %266 = vmatpush2.msra.mxu0 0.0
        %267 = vmatprep.subr.mxu0 0.0
        %268 = vmatpush2.msra.mxu0 0.0
        %269 = vmatprep.subr.mxu0 0.0
        %270 = vmatpush2.msra.mxu0 0.0
        %271 = vmatprep.subr.mxu0 0.0
        %272 = vmatpush2.msra.mxu0 0.0
        %273 = vmatprep.subr.mxu0 0.0
        %274 = vmatpush2.msra.mxu0 0.0
        %275 = vmatprep.subr.mxu0 0.0
        %276 = vmatpush2.msra.mxu0 0.0
        %277 = vmatprep.subr.mxu0 0.0
        %278 = vmatpush2.msra.mxu0 0.0
        %279 = vmatprep.subr.mxu0 0.0
        %280 = vmatpush2.msra.mxu0 0.0
        %281 = vmatprep.mubr.f32.mxu0 0.0
        %282 = vmatmul.mubr.f32.gmra.mxu0 %v215
        %v283 = vpop.f32.mrf.mxu0
        %v284 = vadd.f32 %v211, %v283
        %v285 = vpop.f32.mrf.mxu0
        %286 = vdwg.mxu0
        %288 = vrot.lane.b32.xlu0 %v284, 120
        %v289 = vpop.permute.xlu0 %288
        %291 = vrot.lane.b32.xlu0 %v284, 112
        %v292 = vpop.permute.xlu0 %291
        %294 = vrot.lane.b32.xlu0 %v284, 104
        %v295 = vpop.permute.xlu0 %294
        %v297 = vmul.f32 %v284, 0.35355338
        %v298 = vmul.f32 %v289, 0.35355338
        %v299 = vmul.f32 %v292, 0.35355338
        %v300 = vmul.f32 %v295, 0.35355338
        %301 = vrot.lane.b32.xlu0 %v284, 96
        %v302 = vpop.permute.xlu0 %301
        %vm303 = vcmask 64512
        %v305 = vsel %vm303, %v297, 0
        %v307 = vsel %vm303, %v302, 0
        %309 = vmatprep.subr.mxu0 0.0
        %310 = vmatpush1.xpose.msra.mxu0 0.0
        %311 = vmatprep.subr.mxu0 0.0
        %312 = vmatpush1.xpose.msra.mxu0 0.0
        %313 = vmatprep.subr.mxu0 0.0
        %314 = vmatpush1.xpose.msra.mxu0 0.0
        %315 = vmatprep.subr.mxu0 0.0
        %316 = vmatpush1.xpose.msra.mxu0 0.0
        %317 = vmatprep.subr.mxu0 0.0
        %318 = vmatpush1.xpose.msra.mxu0 0.0
        %319 = vmatprep.subr.mxu0 0.0
        %320 = vmatpush1.xpose.msra.mxu0 0.0
        %321 = vmatprep.subr.mxu0 0.0
        %322 = vmatpush1.xpose.msra.mxu0 0.0
        %323 = vmatprep.subr.mxu0 0.0
        %324 = vmatpush1.xpose.msra.mxu0 0.0
        %325 = vmatprep.subr.mxu0 0.0
        %326 = vmatpush1.xpose.msra.mxu0 0.0
        %327 = vmatprep.subr.mxu0 0.0
        %328 = vmatpush1.xpose.msra.mxu0 0.0
        %329 = vmatprep.subr.mxu0 0.0
        %330 = vmatpush1.xpose.msra.mxu0 0.0
        %331 = vmatprep.subr.mxu0 0.0
        %332 = vmatpush1.xpose.msra.mxu0 0.0
        %333 = vmatprep.subr.mxu0 0.0
        %334 = vmatpush1.xpose.msra.mxu0 0.0
        %335 = vmatprep.subr.mxu0 0.0
        %336 = vmatpush1.xpose.msra.mxu0 0.0
        %337 = vmatprep.subr.mxu0 0.0
        %338 = vmatpush1.xpose.msra.mxu0 0.0
        %339 = vmatprep.subr.mxu0 0.0
        %340 = vmatpush1.xpose.msra.mxu0 %v307
        %341 = vmatprep.subr.mxu0 0.0
        %342 = vmatpush2.xpose.msra.mxu0 0.0
        %343 = vmatprep.subr.mxu0 0.0
        %344 = vmatpush2.xpose.msra.mxu0 0.0
        %345 = vmatprep.subr.mxu0 0.0
        %346 = vmatpush2.xpose.msra.mxu0 0.0
        %347 = vmatprep.subr.mxu0 0.0
        %348 = vmatpush2.xpose.msra.mxu0 0.0
        %349 = vmatprep.subr.mxu0 0.0
        %350 = vmatpush2.xpose.msra.mxu0 0.0
        %351 = vmatprep.subr.mxu0 0.0
        %352 = vmatpush2.xpose.msra.mxu0 0.0
        %353 = vmatprep.subr.mxu0 0.0
        %354 = vmatpush2.xpose.msra.mxu0 0.0
        %355 = vmatprep.subr.mxu0 0.0
        %356 = vmatpush2.xpose.msra.mxu0 0.0
        %357 = vmatprep.subr.mxu0 0.0
        %358 = vmatpush2.xpose.msra.mxu0 0.0
        %359 = vmatprep.subr.mxu0 0.0
        %360 = vmatpush2.xpose.msra.mxu0 0.0
        %361 = vmatprep.subr.mxu0 0.0
        %362 = vmatpush2.xpose.msra.mxu0 0.0
        %363 = vmatprep.subr.mxu0 0.0
        %364 = vmatpush2.xpose.msra.mxu0 0.0
        %365 = vmatprep.subr.mxu0 0.0
        %366 = vmatpush2.xpose.msra.mxu0 0.0
        %367 = vmatprep.subr.mxu0 0.0
        %368 = vmatpush2.xpose.msra.mxu0 0.0
        %369 = vmatprep.subr.mxu0 0.0
        %370 = vmatpush2.xpose.msra.mxu0 0.0
        %371 = vmatprep.subr.mxu0 0.0
        %372 = vmatpush2.xpose.msra.mxu0 0.0
        %373 = vmatprep.mubr.f32.mxu0 0.0
        %374 = vmatmul.mubr.f32.gmra.mxu0 %v305
        %v375 = vpop.f32.mrf.mxu0
        %v376 = vadd.f32 0.0, %v375
        %v377 = vpop.f32.mrf.mxu0
        %378 = vdwg.mxu0
        %379 = vrot.lane.b32.xlu0 %v289, 96
        %v380 = vpop.permute.xlu0 %379
        %v382 = vsel %vm303, %v298, 0
        %v384 = vsel %vm303, %v380, 0
        %386 = vmatprep.subr.mxu0 0.0
        %387 = vmatpush1.xpose.msra.mxu0 0.0
        %388 = vmatprep.subr.mxu0 0.0
        %389 = vmatpush1.xpose.msra.mxu0 0.0
        %390 = vmatprep.subr.mxu0 0.0
        %391 = vmatpush1.xpose.msra.mxu0 0.0
        %392 = vmatprep.subr.mxu0 0.0
        %393 = vmatpush1.xpose.msra.mxu0 0.0
        %394 = vmatprep.subr.mxu0 0.0
        %395 = vmatpush1.xpose.msra.mxu0 0.0
        %396 = vmatprep.subr.mxu0 0.0
        %397 = vmatpush1.xpose.msra.mxu0 0.0
        %398 = vmatprep.subr.mxu0 0.0
        %399 = vmatpush1.xpose.msra.mxu0 0.0
        %400 = vmatprep.subr.mxu0 0.0
        %401 = vmatpush1.xpose.msra.mxu0 0.0
        %402 = vmatprep.subr.mxu0 0.0
        %403 = vmatpush1.xpose.msra.mxu0 0.0
        %404 = vmatprep.subr.mxu0 0.0
        %405 = vmatpush1.xpose.msra.mxu0 0.0
        %406 = vmatprep.subr.mxu0 0.0
        %407 = vmatpush1.xpose.msra.mxu0 0.0
        %408 = vmatprep.subr.mxu0 0.0
        %409 = vmatpush1.xpose.msra.mxu0 0.0
        %410 = vmatprep.subr.mxu0 0.0
        %411 = vmatpush1.xpose.msra.mxu0 0.0
        %412 = vmatprep.subr.mxu0 0.0
        %413 = vmatpush1.xpose.msra.mxu0 0.0
        %414 = vmatprep.subr.mxu0 0.0
        %415 = vmatpush1.xpose.msra.mxu0 0.0
        %416 = vmatprep.subr.mxu0 0.0
        %417 = vmatpush1.xpose.msra.mxu0 %v384
        %418 = vmatprep.subr.mxu0 0.0
        %419 = vmatpush2.xpose.msra.mxu0 0.0
        %420 = vmatprep.subr.mxu0 0.0
        %421 = vmatpush2.xpose.msra.mxu0 0.0
        %422 = vmatprep.subr.mxu0 0.0
        %423 = vmatpush2.xpose.msra.mxu0 0.0
        %424 = vmatprep.subr.mxu0 0.0
        %425 = vmatpush2.xpose.msra.mxu0 0.0
        %426 = vmatprep.subr.mxu0 0.0
        %427 = vmatpush2.xpose.msra.mxu0 0.0
        %428 = vmatprep.subr.mxu0 0.0
        %429 = vmatpush2.xpose.msra.mxu0 0.0
        %430 = vmatprep.subr.mxu0 0.0
        %431 = vmatpush2.xpose.msra.mxu0 0.0
        %432 = vmatprep.subr.mxu0 0.0
        %433 = vmatpush2.xpose.msra.mxu0 0.0
        %434 = vmatprep.subr.mxu0 0.0
        %435 = vmatpush2.xpose.msra.mxu0 0.0
        %436 = vmatprep.subr.mxu0 0.0
        %437 = vmatpush2.xpose.msra.mxu0 0.0
        %438 = vmatprep.subr.mxu0 0.0
        %439 = vmatpush2.xpose.msra.mxu0 0.0
        %440 = vmatprep.subr.mxu0 0.0
        %441 = vmatpush2.xpose.msra.mxu0 0.0
        %442 = vmatprep.subr.mxu0 0.0
        %443 = vmatpush2.xpose.msra.mxu0 0.0
        %444 = vmatprep.subr.mxu0 0.0
        %445 = vmatpush2.xpose.msra.mxu0 0.0
        %446 = vmatprep.subr.mxu0 0.0
        %447 = vmatpush2.xpose.msra.mxu0 0.0
        %448 = vmatprep.subr.mxu0 0.0
        %449 = vmatpush2.xpose.msra.mxu0 0.0
        %450 = vmatprep.mubr.f32.mxu0 0.0
        %451 = vmatmul.mubr.f32.gmra.mxu0 %v382
        %v452 = vpop.f32.mrf.mxu0
        %v453 = vadd.f32 0.0, %v452
        %v454 = vpop.f32.mrf.mxu0
        %455 = vdwg.mxu0
        %456 = vrot.lane.b32.xlu0 %v292, 96
        %v457 = vpop.permute.xlu0 %456
        %v459 = vsel %vm303, %v299, 0
        %v461 = vsel %vm303, %v457, 0
        %463 = vmatprep.subr.mxu0 0.0
        %464 = vmatpush1.xpose.msra.mxu0 0.0
        %465 = vmatprep.subr.mxu0 0.0
        %466 = vmatpush1.xpose.msra.mxu0 0.0
        %467 = vmatprep.subr.mxu0 0.0
        %468 = vmatpush1.xpose.msra.mxu0 0.0
        %469 = vmatprep.subr.mxu0 0.0
        %470 = vmatpush1.xpose.msra.mxu0 0.0
        %471 = vmatprep.subr.mxu0 0.0
        %472 = vmatpush1.xpose.msra.mxu0 0.0
        %473 = vmatprep.subr.mxu0 0.0
        %474 = vmatpush1.xpose.msra.mxu0 0.0
        %475 = vmatprep.subr.mxu0 0.0
        %476 = vmatpush1.xpose.msra.mxu0 0.0
        %477 = vmatprep.subr.mxu0 0.0
        %478 = vmatpush1.xpose.msra.mxu0 0.0
        %479 = vmatprep.subr.mxu0 0.0
        %480 = vmatpush1.xpose.msra.mxu0 0.0
        %481 = vmatprep.subr.mxu0 0.0
        %482 = vmatpush1.xpose.msra.mxu0 0.0
        %483 = vmatprep.subr.mxu0 0.0
        %484 = vmatpush1.xpose.msra.mxu0 0.0
        %485 = vmatprep.subr.mxu0 0.0
        %486 = vmatpush1.xpose.msra.mxu0 0.0
        %487 = vmatprep.subr.mxu0 0.0
        %488 = vmatpush1.xpose.msra.mxu0 0.0
        %489 = vmatprep.subr.mxu0 0.0
        %490 = vmatpush1.xpose.msra.mxu0 0.0
        %491 = vmatprep.subr.mxu0 0.0
        %492 = vmatpush1.xpose.msra.mxu0 0.0
        %493 = vmatprep.subr.mxu0 0.0
        %494 = vmatpush1.xpose.msra.mxu0 %v461
        %495 = vmatprep.subr.mxu0 0.0
        %496 = vmatpush2.xpose.msra.mxu0 0.0
        %497 = vmatprep.subr.mxu0 0.0
        %498 = vmatpush2.xpose.msra.mxu0 0.0
        %499 = vmatprep.subr.mxu0 0.0
        %500 = vmatpush2.xpose.msra.mxu0 0.0
        %501 = vmatprep.subr.mxu0 0.0
        %502 = vmatpush2.xpose.msra.mxu0 0.0
        %503 = vmatprep.subr.mxu0 0.0
        %504 = vmatpush2.xpose.msra.mxu0 0.0
        %505 = vmatprep.subr.mxu0 0.0
        %506 = vmatpush2.xpose.msra.mxu0 0.0
        %507 = vmatprep.subr.mxu0 0.0
        %508 = vmatpush2.xpose.msra.mxu0 0.0
        %509 = vmatprep.subr.mxu0 0.0
        %510 = vmatpush2.xpose.msra.mxu0 0.0
        %511 = vmatprep.subr.mxu0 0.0
        %512 = vmatpush2.xpose.msra.mxu0 0.0
        %513 = vmatprep.subr.mxu0 0.0
        %514 = vmatpush2.xpose.msra.mxu0 0.0
        %515 = vmatprep.subr.mxu0 0.0
        %516 = vmatpush2.xpose.msra.mxu0 0.0
        %517 = vmatprep.subr.mxu0 0.0
        %518 = vmatpush2.xpose.msra.mxu0 0.0
        %519 = vmatprep.subr.mxu0 0.0
        %520 = vmatpush2.xpose.msra.mxu0 0.0
        %521 = vmatprep.subr.mxu0 0.0
        %522 = vmatpush2.xpose.msra.mxu0 0.0
        %523 = vmatprep.subr.mxu0 0.0
        %524 = vmatpush2.xpose.msra.mxu0 0.0
        %525 = vmatprep.subr.mxu0 0.0
        %526 = vmatpush2.xpose.msra.mxu0 0.0
        %527 = vmatprep.mubr.f32.mxu0 0.0
        %528 = vmatmul.mubr.f32.gmra.mxu0 %v459
        %v529 = vpop.f32.mrf.mxu0
        %v530 = vadd.f32 0.0, %v529
        %v531 = vpop.f32.mrf.mxu0
        %532 = vdwg.mxu0
        %533 = vrot.lane.b32.xlu0 %v295, 96
        %v534 = vpop.permute.xlu0 %533
        %v536 = vsel %vm303, %v300, 0
        %v538 = vsel %vm303, %v534, 0
        %540 = vmatprep.subr.mxu0 0.0
        %541 = vmatpush1.xpose.msra.mxu0 0.0
        %542 = vmatprep.subr.mxu0 0.0
        %543 = vmatpush1.xpose.msra.mxu0 0.0
        %544 = vmatprep.subr.mxu0 0.0
        %545 = vmatpush1.xpose.msra.mxu0 0.0
        %546 = vmatprep.subr.mxu0 0.0
        %547 = vmatpush1.xpose.msra.mxu0 0.0
        %548 = vmatprep.subr.mxu0 0.0
        %549 = vmatpush1.xpose.msra.mxu0 0.0
        %550 = vmatprep.subr.mxu0 0.0
        %551 = vmatpush1.xpose.msra.mxu0 0.0
        %552 = vmatprep.subr.mxu0 0.0
        %553 = vmatpush1.xpose.msra.mxu0 0.0
        %554 = vmatprep.subr.mxu0 0.0
        %555 = vmatpush1.xpose.msra.mxu0 0.0
        %556 = vmatprep.subr.mxu0 0.0
        %557 = vmatpush1.xpose.msra.mxu0 0.0
        %558 = vmatprep.subr.mxu0 0.0
        %559 = vmatpush1.xpose.msra.mxu0 0.0
        %560 = vmatprep.subr.mxu0 0.0
        %561 = vmatpush1.xpose.msra.mxu0 0.0
        %562 = vmatprep.subr.mxu0 0.0
        %563 = vmatpush1.xpose.msra.mxu0 0.0
        %564 = vmatprep.subr.mxu0 0.0
        %565 = vmatpush1.xpose.msra.mxu0 0.0
        %566 = vmatprep.subr.mxu0 0.0
        %567 = vmatpush1.xpose.msra.mxu0 0.0
        %568 = vmatprep.subr.mxu0 0.0
        %569 = vmatpush1.xpose.msra.mxu0 0.0
        %570 = vmatprep.subr.mxu0 0.0
        %571 = vmatpush1.xpose.msra.mxu0 %v538
        %572 = vmatprep.subr.mxu0 0.0
        %573 = vmatpush2.xpose.msra.mxu0 0.0
        %574 = vmatprep.subr.mxu0 0.0
        %575 = vmatpush2.xpose.msra.mxu0 0.0
        %576 = vmatprep.subr.mxu0 0.0
        %577 = vmatpush2.xpose.msra.mxu0 0.0
        %578 = vmatprep.subr.mxu0 0.0
        %579 = vmatpush2.xpose.msra.mxu0 0.0
        %580 = vmatprep.subr.mxu0 0.0
        %581 = vmatpush2.xpose.msra.mxu0 0.0
        %582 = vmatprep.subr.mxu0 0.0
        %583 = vmatpush2.xpose.msra.mxu0 0.0
        %584 = vmatprep.subr.mxu0 0.0
        %585 = vmatpush2.xpose.msra.mxu0 0.0
        %586 = vmatprep.subr.mxu0 0.0
        %587 = vmatpush2.xpose.msra.mxu0 0.0
        %588 = vmatprep.subr.mxu0 0.0
        %589 = vmatpush2.xpose.msra.mxu0 0.0
        %590 = vmatprep.subr.mxu0 0.0
        %591 = vmatpush2.xpose.msra.mxu0 0.0
        %592 = vmatprep.subr.mxu0 0.0
        %593 = vmatpush2.xpose.msra.mxu0 0.0
        %594 = vmatprep.subr.mxu0 0.0
        %595 = vmatpush2.xpose.msra.mxu0 0.0
        %596 = vmatprep.subr.mxu0 0.0
        %597 = vmatpush2.xpose.msra.mxu0 0.0
        %598 = vmatprep.subr.mxu0 0.0
        %599 = vmatpush2.xpose.msra.mxu0 0.0
        %600 = vmatprep.subr.mxu0 0.0
        %601 = vmatpush2.xpose.msra.mxu0 0.0
        %602 = vmatprep.subr.mxu0 0.0
        %603 = vmatpush2.xpose.msra.mxu0 0.0
        %604 = vmatprep.mubr.f32.mxu0 0.0
        %605 = vmatmul.mubr.f32.gmra.mxu0 %v536
        %v606 = vpop.f32.mrf.mxu0
        %v607 = vadd.f32 0.0, %v606
        %v608 = vpop.f32.mrf.mxu0
        %609 = vdwg.mxu0
        %v610 = vsel %vm303, %v376, -inf
        %611 = vmax.xlane.f32.xlu0 %v610
        %v612 = vpop.xlane.xlu0 %611
        %v613 = vsel %vm303, %v453, -inf
        %614 = vmax.xlane.f32.xlu0 %v613
        %v615 = vpop.xlane.xlu0 %614
        %v616 = vsel %vm303, %v530, -inf
        %617 = vmax.xlane.f32.xlu0 %v616
        %v618 = vpop.xlane.xlu0 %617
        %v619 = vsel %vm303, %v607, -inf
        %620 = vmax.xlane.f32.xlu0 %v619
        %v621 = vpop.xlane.xlu0 %620
        %v622 = vsub.f32 %v376, %v612
        %v623 = vsub.f32 %v453, %v615
        %v624 = vsub.f32 %v530, %v618
        %v625 = vsub.f32 %v607, %v621
        %v626 = vmul.f32 %v622, 1.442695
        %v627 = vpow.pop %v626
        %v628 = vmul.f32 %v623, 1.442695
        %v629 = vpow.pop %v628
        %v630 = vmul.f32 %v624, 1.442695
        %v631 = vpow.pop %v630
        %v632 = vmul.f32 %v625, 1.442695
        %v633 = vpow.pop %v632
        %v634 = vsel %vm303, %v627, 0.0
        %635 = vadd.xlane.f32.xlu0 %v634
        %v636 = vpop.xlane.xlu0 %635
        %v637 = vsel %vm303, %v629, 0.0
        %638 = vadd.xlane.f32.xlu0 %v637
        %v639 = vpop.xlane.xlu0 %638
        %v640 = vsel %vm303, %v631, 0.0
        %641 = vadd.xlane.f32.xlu0 %v640
        %v642 = vpop.xlane.xlu0 %641
        %v643 = vsel %vm303, %v633, 0.0
        %644 = vadd.xlane.f32.xlu0 %v643
        %v645 = vpop.xlane.xlu0 %644
        %v646 = vrcp.pop %v636
        %v647 = vrcp.pop %v639
        %v648 = vrcp.pop %v642
        %v649 = vrcp.pop %v645
        %v650 = vmul.f32 %v627, %v646
        %v651 = vmul.f32 %v629, %v647
        %v652 = vmul.f32 %v631, %v648
        %v653 = vmul.f32 %v633, %v649
        %654 = vrot.lane.b32.xlu0 %v284, 64
        %v655 = vpop.permute.xlu0 %654
        %v658 = vsel %vm303, %v650, 0
        %660 = vmatprep.subr.mxu0 0.0
        %661 = vmatpush1.msra.mxu0 0.0
        %662 = vmatprep.subr.mxu0 0.0
        %663 = vmatpush1.msra.mxu0 0.0
        %664 = vmatprep.subr.mxu0 0.0
        %665 = vmatpush1.msra.mxu0 0.0
        %666 = vmatprep.subr.mxu0 0.0
        %667 = vmatpush1.msra.mxu0 0.0
        %668 = vmatprep.subr.mxu0 0.0
        %669 = vmatpush1.msra.mxu0 0.0
        %670 = vmatprep.subr.mxu0 0.0
        %671 = vmatpush1.msra.mxu0 0.0
        %672 = vmatprep.subr.mxu0 0.0
        %673 = vmatpush1.msra.mxu0 0.0
        %674 = vmatprep.subr.mxu0 0.0
        %675 = vmatpush1.msra.mxu0 0.0
        %676 = vmatprep.subr.mxu0 0.0
        %677 = vmatpush1.msra.mxu0 0.0
        %678 = vmatprep.subr.mxu0 0.0
        %679 = vmatpush1.msra.mxu0 0.0
        %680 = vmatprep.subr.mxu0 0.0
        %681 = vmatpush1.msra.mxu0 0.0
        %682 = vmatprep.subr.mxu0 0.0
        %683 = vmatpush1.msra.mxu0 0.0
        %684 = vmatprep.subr.mxu0 0.0
        %685 = vmatpush1.msra.mxu0 0.0
        %686 = vmatprep.subr.mxu0 0.0
        %687 = vmatpush1.msra.mxu0 0.0
        %688 = vmatprep.subr.mxu0 0.0
        %689 = vmatpush1.msra.mxu0 0.0
        %690 = vmatprep.subr.mxu0 0.0
        %691 = vmatpush1.msra.mxu0 %v655
        %692 = vmatprep.subr.mxu0 0.0
        %693 = vmatpush2.msra.mxu0 0.0
        %694 = vmatprep.subr.mxu0 0.0
        %695 = vmatpush2.msra.mxu0 0.0
        %696 = vmatprep.subr.mxu0 0.0
        %697 = vmatpush2.msra.mxu0 0.0
        %698 = vmatprep.subr.mxu0 0.0
        %699 = vmatpush2.msra.mxu0 0.0
        %700 = vmatprep.subr.mxu0 0.0
        %701 = vmatpush2.msra.mxu0 0.0
        %702 = vmatprep.subr.mxu0 0.0
        %703 = vmatpush2.msra.mxu0 0.0
        %704 = vmatprep.subr.mxu0 0.0
        %705 = vmatpush2.msra.mxu0 0.0
        %706 = vmatprep.subr.mxu0 0.0
        %707 = vmatpush2.msra.mxu0 0.0
        %708 = vmatprep.subr.mxu0 0.0
        %709 = vmatpush2.msra.mxu0 0.0
        %710 = vmatprep.subr.mxu0 0.0
        %711 = vmatpush2.msra.mxu0 0.0
        %712 = vmatprep.subr.mxu0 0.0
        %713 = vmatpush2.msra.mxu0 0.0
        %714 = vmatprep.subr.mxu0 0.0
        %715 = vmatpush2.msra.mxu0 0.0
        %716 = vmatprep.subr.mxu0 0.0
        %717 = vmatpush2.msra.mxu0 0.0
        %718 = vmatprep.subr.mxu0 0.0
        %719 = vmatpush2.msra.mxu0 0.0
        %720 = vmatprep.subr.mxu0 0.0
        %721 = vmatpush2.msra.mxu0 0.0
        %722 = vmatprep.subr.mxu0 0.0
        %723 = vmatpush2.msra.mxu0 0.0
        %724 = vmatprep.mubr.f32.mxu0 0.0
        %725 = vmatmul.mubr.f32.gmra.mxu0 %v658
        %v726 = vpop.f32.mrf.mxu0
        %v727 = vadd.f32 0.0, %v726
        %v728 = vpop.f32.mrf.mxu0
        %729 = vdwg.mxu0
        %730 = vrot.lane.b32.xlu0 %v289, 64
        %v731 = vpop.permute.xlu0 %730
        %v734 = vsel %vm303, %v651, 0
        %736 = vmatprep.subr.mxu0 0.0
        %737 = vmatpush1.msra.mxu0 0.0
        %738 = vmatprep.subr.mxu0 0.0
        %739 = vmatpush1.msra.mxu0 0.0
        %740 = vmatprep.subr.mxu0 0.0
        %741 = vmatpush1.msra.mxu0 0.0
        %742 = vmatprep.subr.mxu0 0.0
        %743 = vmatpush1.msra.mxu0 0.0
        %744 = vmatprep.subr.mxu0 0.0
        %745 = vmatpush1.msra.mxu0 0.0
        %746 = vmatprep.subr.mxu0 0.0
        %747 = vmatpush1.msra.mxu0 0.0
        %748 = vmatprep.subr.mxu0 0.0
        %749 = vmatpush1.msra.mxu0 0.0
        %750 = vmatprep.subr.mxu0 0.0
        %751 = vmatpush1.msra.mxu0 0.0
        %752 = vmatprep.subr.mxu0 0.0
        %753 = vmatpush1.msra.mxu0 0.0
        %754 = vmatprep.subr.mxu0 0.0
        %755 = vmatpush1.msra.mxu0 0.0
        %756 = vmatprep.subr.mxu0 0.0
        %757 = vmatpush1.msra.mxu0 0.0
        %758 = vmatprep.subr.mxu0 0.0
        %759 = vmatpush1.msra.mxu0 0.0
        %760 = vmatprep.subr.mxu0 0.0
        %761 = vmatpush1.msra.mxu0 0.0
        %762 = vmatprep.subr.mxu0 0.0
        %763 = vmatpush1.msra.mxu0 0.0
        %764 = vmatprep.subr.mxu0 0.0
        %765 = vmatpush1.msra.mxu0 0.0
        %766 = vmatprep.subr.mxu0 0.0
        %767 = vmatpush1.msra.mxu0 %v731
        %768 = vmatprep.subr.mxu0 0.0
        %769 = vmatpush2.msra.mxu0 0.0
        %770 = vmatprep.subr.mxu0 0.0
        %771 = vmatpush2.msra.mxu0 0.0
        %772 = vmatprep.subr.mxu0 0.0
        %773 = vmatpush2.msra.mxu0 0.0
        %774 = vmatprep.subr.mxu0 0.0
        %775 = vmatpush2.msra.mxu0 0.0
        %776 = vmatprep.subr.mxu0 0.0
        %777 = vmatpush2.msra.mxu0 0.0
        %778 = vmatprep.subr.mxu0 0.0
        %779 = vmatpush2.msra.mxu0 0.0
        %780 = vmatprep.subr.mxu0 0.0
        %781 = vmatpush2.msra.mxu0 0.0
        %782 = vmatprep.subr.mxu0 0.0
        %783 = vmatpush2.msra.mxu0 0.0
        %784 = vmatprep.subr.mxu0 0.0
        %785 = vmatpush2.msra.mxu0 0.0
        %786 = vmatprep.subr.mxu0 0.0
        %787 = vmatpush2.msra.mxu0 0.0
        %788 = vmatprep.subr.mxu0 0.0
        %789 = vmatpush2.msra.mxu0 0.0
        %790 = vmatprep.subr.mxu0 0.0
        %791 = vmatpush2.msra.mxu0 0.0
        %792 = vmatprep.subr.mxu0 0.0
        %793 = vmatpush2.msra.mxu0 0.0
        %794 = vmatprep.subr.mxu0 0.0
        %795 = vmatpush2.msra.mxu0 0.0
        %796 = vmatprep.subr.mxu0 0.0
        %797 = vmatpush2.msra.mxu0 0.0
        %798 = vmatprep.subr.mxu0 0.0
        %799 = vmatpush2.msra.mxu0 0.0
        %800 = vmatprep.mubr.f32.mxu0 0.0
        %801 = vmatmul.mubr.f32.gmra.mxu0 %v734
        %v802 = vpop.f32.mrf.mxu0
        %v803 = vadd.f32 0.0, %v802
        %v804 = vpop.f32.mrf.mxu0
        %805 = vdwg.mxu0
        %806 = vrot.lane.b32.xlu0 %v292, 64
        %v807 = vpop.permute.xlu0 %806
        %v810 = vsel %vm303, %v652, 0
        %812 = vmatprep.subr.mxu0 0.0
        %813 = vmatpush1.msra.mxu0 0.0
        %814 = vmatprep.subr.mxu0 0.0
        %815 = vmatpush1.msra.mxu0 0.0
        %816 = vmatprep.subr.mxu0 0.0
        %817 = vmatpush1.msra.mxu0 0.0
        %818 = vmatprep.subr.mxu0 0.0
        %819 = vmatpush1.msra.mxu0 0.0
        %820 = vmatprep.subr.mxu0 0.0
        %821 = vmatpush1.msra.mxu0 0.0
        %822 = vmatprep.subr.mxu0 0.0
        %823 = vmatpush1.msra.mxu0 0.0
        %824 = vmatprep.subr.mxu0 0.0
        %825 = vmatpush1.msra.mxu0 0.0
        %826 = vmatprep.subr.mxu0 0.0
        %827 = vmatpush1.msra.mxu0 0.0
        %828 = vmatprep.subr.mxu0 0.0
        %829 = vmatpush1.msra.mxu0 0.0
        %830 = vmatprep.subr.mxu0 0.0
        %831 = vmatpush1.msra.mxu0 0.0
        %832 = vmatprep.subr.mxu0 0.0
        %833 = vmatpush1.msra.mxu0 0.0
        %834 = vmatprep.subr.mxu0 0.0
        %835 = vmatpush1.msra.mxu0 0.0
        %836 = vmatprep.subr.mxu0 0.0
        %837 = vmatpush1.msra.mxu0 0.0
        %838 = vmatprep.subr.mxu0 0.0
        %839 = vmatpush1.msra.mxu0 0.0
        %840 = vmatprep.subr.mxu0 0.0
        %841 = vmatpush1.msra.mxu0 0.0
        %842 = vmatprep.subr.mxu0 0.0
        %843 = vmatpush1.msra.mxu0 %v807
        %844 = vmatprep.subr.mxu0 0.0
        %845 = vmatpush2.msra.mxu0 0.0
        %846 = vmatprep.subr.mxu0 0.0
        %847 = vmatpush2.msra.mxu0 0.0
        %848 = vmatprep.subr.mxu0 0.0
        %849 = vmatpush2.msra.mxu0 0.0
        %850 = vmatprep.subr.mxu0 0.0
        %851 = vmatpush2.msra.mxu0 0.0
        %852 = vmatprep.subr.mxu0 0.0
        %853 = vmatpush2.msra.mxu0 0.0
        %854 = vmatprep.subr.mxu0 0.0
        %855 = vmatpush2.msra.mxu0 0.0
        %856 = vmatprep.subr.mxu0 0.0
        %857 = vmatpush2.msra.mxu0 0.0
        %858 = vmatprep.subr.mxu0 0.0
        %859 = vmatpush2.msra.mxu0 0.0
        %860 = vmatprep.subr.mxu0 0.0
        %861 = vmatpush2.msra.mxu0 0.0
        %862 = vmatprep.subr.mxu0 0.0
        %863 = vmatpush2.msra.mxu0 0.0
        %864 = vmatprep.subr.mxu0 0.0
        %865 = vmatpush2.msra.mxu0 0.0
        %866 = vmatprep.subr.mxu0 0.0
        %867 = vmatpush2.msra.mxu0 0.0
        %868 = vmatprep.subr.mxu0 0.0
        %869 = vmatpush2.msra.mxu0 0.0
        %870 = vmatprep.subr.mxu0 0.0
        %871 = vmatpush2.msra.mxu0 0.0
        %872 = vmatprep.subr.mxu0 0.0
        %873 = vmatpush2.msra.mxu0 0.0
        %874 = vmatprep.subr.mxu0 0.0
        %875 = vmatpush2.msra.mxu0 0.0
        %876 = vmatprep.mubr.f32.mxu0 0.0
        %877 = vmatmul.mubr.f32.gmra.mxu0 %v810
        %v878 = vpop.f32.mrf.mxu0
        %v879 = vadd.f32 0.0, %v878
        %v880 = vpop.f32.mrf.mxu0
        %881 = vdwg.mxu0
        %882 = vrot.lane.b32.xlu0 %v295, 64
        %v883 = vpop.permute.xlu0 %882
        %v886 = vsel %vm303, %v653, 0
        %888 = vmatprep.subr.mxu0 0.0
        %889 = vmatpush1.msra.mxu0 0.0
        %890 = vmatprep.subr.mxu0 0.0
        %891 = vmatpush1.msra.mxu0 0.0
        %892 = vmatprep.subr.mxu0 0.0
        %893 = vmatpush1.msra.mxu0 0.0
        %894 = vmatprep.subr.mxu0 0.0
        %895 = vmatpush1.msra.mxu0 0.0
        %896 = vmatprep.subr.mxu0 0.0
        %897 = vmatpush1.msra.mxu0 0.0
        %898 = vmatprep.subr.mxu0 0.0
        %899 = vmatpush1.msra.mxu0 0.0
        %900 = vmatprep.subr.mxu0 0.0
        %901 = vmatpush1.msra.mxu0 0.0
        %902 = vmatprep.subr.mxu0 0.0
        %903 = vmatpush1.msra.mxu0 0.0
        %904 = vmatprep.subr.mxu0 0.0
        %905 = vmatpush1.msra.mxu0 0.0
        %906 = vmatprep.subr.mxu0 0.0
        %907 = vmatpush1.msra.mxu0 0.0
        %908 = vmatprep.subr.mxu0 0.0
        %909 = vmatpush1.msra.mxu0 0.0
        %910 = vmatprep.subr.mxu0 0.0
        %911 = vmatpush1.msra.mxu0 0.0
        %912 = vmatprep.subr.mxu0 0.0
        %913 = vmatpush1.msra.mxu0 0.0
        %914 = vmatprep.subr.mxu0 0.0
        %915 = vmatpush1.msra.mxu0 0.0
        %916 = vmatprep.subr.mxu0 0.0
        %917 = vmatpush1.msra.mxu0 0.0
        %918 = vmatprep.subr.mxu0 0.0
        %919 = vmatpush1.msra.mxu0 %v883
        %920 = vmatprep.subr.mxu0 0.0
        %921 = vmatpush2.msra.mxu0 0.0
        %922 = vmatprep.subr.mxu0 0.0
        %923 = vmatpush2.msra.mxu0 0.0
        %924 = vmatprep.subr.mxu0 0.0
        %925 = vmatpush2.msra.mxu0 0.0
        %926 = vmatprep.subr.mxu0 0.0
        %927 = vmatpush2.msra.mxu0 0.0
        %928 = vmatprep.subr.mxu0 0.0
        %929 = vmatpush2.msra.mxu0 0.0
        %930 = vmatprep.subr.mxu0 0.0
        %931 = vmatpush2.msra.mxu0 0.0
        %932 = vmatprep.subr.mxu0 0.0
        %933 = vmatpush2.msra.mxu0 0.0
        %934 = vmatprep.subr.mxu0 0.0
        %935 = vmatpush2.msra.mxu0 0.0
        %936 = vmatprep.subr.mxu0 0.0
        %937 = vmatpush2.msra.mxu0 0.0
        %938 = vmatprep.subr.mxu0 0.0
        %939 = vmatpush2.msra.mxu0 0.0
        %940 = vmatprep.subr.mxu0 0.0
        %941 = vmatpush2.msra.mxu0 0.0
        %942 = vmatprep.subr.mxu0 0.0
        %943 = vmatpush2.msra.mxu0 0.0
        %944 = vmatprep.subr.mxu0 0.0
        %945 = vmatpush2.msra.mxu0 0.0
        %946 = vmatprep.subr.mxu0 0.0
        %947 = vmatpush2.msra.mxu0 0.0
        %948 = vmatprep.subr.mxu0 0.0
        %949 = vmatpush2.msra.mxu0 0.0
        %950 = vmatprep.subr.mxu0 0.0
        %951 = vmatpush2.msra.mxu0 0.0
        %952 = vmatprep.mubr.f32.mxu0 0.0
        %953 = vmatmul.mubr.f32.gmra.mxu0 %v886
        %v954 = vpop.f32.mrf.mxu0
        %v955 = vadd.f32 0.0, %v954
        %v956 = vpop.f32.mrf.mxu0
        %957 = vdwg.mxu0
        %959 = vrot.lane.b32.xlu0 %v803, 8
        %v960 = vpop.permute.xlu0 %959
        %963 = vrot.lane.b32.xlu0 %v879, 16
        %v964 = vpop.permute.xlu0 %963
        %967 = vrot.lane.b32.xlu0 %v955, 24
        %v968 = vpop.permute.xlu0 %967
        %v970 = vsel %vm303, %v727, %v960
        %vm971 = vcmask 130048
        %v972 = vsel %vm971, %v970, %v964
        %vm973 = vcmask 195584
        %v974 = vsel %vm973, %v972, %v968
        %975 = vst.msk [vmem:[%s200] sm:$0xff] %vm213, %v974
        %s976 = sand.u32 %s97, 1
        %s977 = scalar_lea.sflag [#allocation4], %s976
        %s978 = sand.u32 %s97, 1
        %s979 = smul.addr %s978, 8
        %s980 = scalar_lea.vmem [#allocation7], %s979
        // Predicated region
        $region41: #{self_attention.1} parent=31 // pred_check
          %p981 = pneg %p107
        $region42: #{self_attention.1} parent=31 // pred_check_branch
          %983 = sbr.rel (%p981) target = $region44
        $region43: #{self_attention.1} parent=31 // pred_region
          %s985 = ssub.s32 128, 128
          %986 = vsyncadd %s977, %s985
          %s987 = smul.addr %s21, 128
          %s988 = scalar_lea.hbm %s3, %s987
          %s990 = sshll.u32 %s980, 4
          %s991 = int_to_ptr.vmem [resolvable:$true] %s990
          %993 = dma.vmem_to_hbm [thread:$0]  %s991, 128, %s988, %s977
        $region44: #{self_attention.1} parent=31 // pred_fallthru
          _
      $region32: #{self_attention.1} parent=5 // pred_fallthru
        _
      %p994 = scmp.le.s32.totalorder 2, %s16
      // Predicated region
      $region45: #{self_attention.1} parent=5 // pred_check
        %p995 = pneg %p994
      $region46: #{self_attention.1} parent=5 // pred_check_branch
        %997 = sbr.rel (%p995) target = $region48
      $region47: #{self_attention.1} parent=5 // pred_region
        %s998 = ssub.s32 %s16, 2
        // Predicated region
        $region49: #{self_attention.1} parent=47 // pred_check
          %p999 = pneg %p113
        $region50: #{self_attention.1} parent=47 // pred_check_branch
          %1001 = sbr.rel (%p999) target = $region52
        $region51: #{self_attention.1} parent=47 // pred_region
          %s1002 = sand.u32 %s98, 1
          %s1003 = scalar_lea.sflag [#allocation4], %s1002
          %s1004 = sand.u32 %s98, 1
          %s1005 = smul.addr %s1004, 8
          %s1006 = scalar_lea.vmem [#allocation7], %s1005
          %1007 = dma.done %s1003, 128
        $region52: #{self_attention.1} parent=47 // pred_fallthru
          _
      $region48: #{self_attention.1} parent=5 // pred_fallthru
        _
    $region6: #{self_attention.1} parent=1 // loop_footer
      %s20 = sadd.s32 1, %s16
    $region7: #{self_attention.1} parent=1 // loop_footer_branch
      %15 = sbr.rel target = $region3
    $region8: #{self_attention.1} parent=1 // loop_exit
      _
    %1008 = vsyncpa [#allocation3], 1
    %s1009 = scalar_lea.sflag [#allocation3], 1
    %1010 = vsyncpa %s1009, 1
    %1011 = vsyncpa [#allocation6], 1
    %1012 = vsyncpa [#allocation4], 1
    %s1013 = scalar_lea.sflag [#allocation4], 1
    %1014 = vsyncpa %s1013, 1

</llo_original>
